<compile_context>
chip_gen: v7x
topology: tpu7x:2x2x1
jax: 0.10.0
libtpu: 0.0.40
codegen_flags: <defaults>
</compile_context>

<pallas_src>
import jax
import jax.numpy as jnp
from jax.experimental import pallas as pl
from jax.experimental.pallas import tpu as pltpu


_SLAB = 8                       # batch rows packed per slab row
_TS_MAX = 2048                  # max slab rows per grid step (~5-9 MiB/step dbl-buffered)
_TS_SPLIT_FLOOR = 256           # don't shrink tiles below the HBM-roofline knee
_VMEM_LIMIT = 32 * 1024 * 1024  # safe on v5e (16 MiB default) .. v7x (64 MiB physical)


# ---------------------------------------------------------------------------
# Kernel
# ---------------------------------------------------------------------------
def _distiller_kernel(emb_ref, sim_ref, w1_ref, b1_ref, w2a_ref, w2b_ref,
                      b2_ref, out_ref):
    # Layer 1 (residual_predictor): lane-dense matmul, K = 8*D, Nout = 8*N,
    # f32 accumulation regardless of operand dtype.
    residual = jnp.tanh(
        jnp.dot(emb_ref[...], w1_ref[...], preferred_element_type=jnp.float32)
        + b1_ref[...]
    )
    # Layer 2 (dist_predictor): the concat is folded into TWO accumulated dots
    # (sim @ W2a_block + residual @ W2b_block) -- no (ts, 16N) concat buffer.
    w2b = w2b_ref[...]
    pre = (
        jnp.dot(sim_ref[...], w2a_ref[...], preferred_element_type=jnp.float32)
        + jnp.dot(residual.astype(w2b.dtype), w2b,
                  preferred_element_type=jnp.float32)
        + b2_ref[...]
    )
    out_ref[...] = jnp.tanh(pre).astype(out_ref.dtype)


# ---------------------------------------------------------------------------
# One-time parameter preparation (hoisted out of the per-call hot path)
# ---------------------------------------------------------------------------
def _block_diag(w, copies=_SLAB):
    """(k, n) -> (copies*k, copies*n) block-diagonal matrix with `copies` copies."""
    k, n = w.shape
    out = jnp.zeros((copies * k, copies * n), w.dtype)
    for j in range(copies):
        out = out.at[j * k:(j + 1) * k, j * n:(j + 1) * n].set(w)
    return out


def prepare_params(params, compute_dtype=jnp.bfloat16):
    """Convert PyTorch-layout params to kernel-ready slab layout (call once).

    compute_dtype: dtype of the MXU operands (weights + activations).
    bfloat16 halves activation HBM traffic (memory-bound kernel); accumulation
    stays f32. Biases and the small tail-path weights stay f32.
    """
    w1, b1, w2, b2 = (jnp.asarray(params[k], jnp.float32)
                      for k in ("w1", "b1", "w2", "b2"))
    N = w1.shape[0]
    w1_t = w1.T                           # (D, N)
    w2_t = w2.T                           # (2N, N)
    w2a_t, w2b_t = w2_t[:N, :], w2_t[N:, :]
    return {
        # slab-layout operands for the kernel
        "w1_block": _block_diag(w1_t).astype(compute_dtype),    # (8D, 8N)
        "w2a_block": _block_diag(w2a_t).astype(compute_dtype),  # (8N, 8N) (sim half)
        "w2b_block": _block_diag(w2b_t).astype(compute_dtype),  # (8N, 8N) (residual half)
        "b1_tile": jnp.tile(b1, _SLAB).reshape(1, _SLAB * N),   # (1, 8N) f32
        "b2_tile": jnp.tile(b2, _SLAB).reshape(1, _SLAB * N),   # (1, 8N) f32
        # original-layout f32 weights for the tiny (<8 row) jnp tail path
        "w1_t": w1_t, "b1": b1, "w2_t": w2_t, "b2": b2,
    }


# ---------------------------------------------------------------------------
# Tile selection
# ---------------------------------------------------------------------------
def _pick_tile(n_slab_rows):
    if n_slab_rows <= _SLAB:
        return n_slab_rows                # single block == full array (allowed)
    ts = min(_TS_MAX, n_slab_rows)
    # Keep >= 2 grid steps so v7x's two TensorCores both get work, as long as
    # that doesn't push the tile below the HBM-roofline knee (v5e/v6e safe).
    half = ((n_slab_rows + 1) // 2 + _SLAB - 1) // _SLAB * _SLAB
    if half >= _TS_SPLIT_FLOOR:
        ts = min(ts, half)
    return max(_SLAB, (ts // _SLAB) * _SLAB)


# ---------------------------------------------------------------------------
# Wrapper
# ---------------------------------------------------------------------------
def residual_distiller_pallas(new_embedding, new_similarity, prepared):
    """new_embedding: (B, ...) flattened to (B, D); new_similarity: (B, N)."""
    B = new_embedding.shape[0]
    emb = new_embedding.reshape(B, -1)
    sim = new_similarity
    D = emb.shape[1]
    N = sim.shape[1]
    cdtype = prepared["w1_block"].dtype

    B_main = (B // _SLAB) * _SLAB         # rows handled by the kernel
    outs = []

    if B_main:
        B8 = B_main // _SLAB
        # Row-major-compatible ("free") reshapes into lane-dense slabs.
        emb_slab = emb[:B_main].reshape(B8, _SLAB * D).astype(cdtype)
        sim_slab = sim[:B_main].reshape(B8, _SLAB * N).astype(cdtype)

        ts = _pick_tile(B8)
        grid = (pl.cdiv(B8, ts),)

        out_slab = pl.pallas_call(
            _distiller_kernel,
            out_shape=jax.ShapeDtypeStruct((B8, _SLAB * N), jnp.float32),
            grid=grid,
            in_specs=[
                pl.BlockSpec((ts, _SLAB * D), lambda i: (i, 0)),        # emb slab tile
                pl.BlockSpec((ts, _SLAB * N), lambda i: (i, 0)),        # sim slab tile
                pl.BlockSpec((_SLAB * D, _SLAB * N), lambda i: (0, 0)), # W1 (resident)
                pl.BlockSpec((1, _SLAB * N), lambda i: (0, 0)),         # b1 (resident)
                pl.BlockSpec((_SLAB * N, _SLAB * N), lambda i: (0, 0)), # W2a (resident)
                pl.BlockSpec((_SLAB * N, _SLAB * N), lambda i: (0, 0)), # W2b (resident)
                pl.BlockSpec((1, _SLAB * N), lambda i: (0, 0)),         # b2 (resident)
            ],
            out_specs=pl.BlockSpec((ts, _SLAB * N), lambda i: (i, 0)),
            compiler_params=pltpu.CompilerParams(
                dimension_semantics=("parallel",),      # megacore on v7x
                vmem_limit_bytes=_VMEM_LIMIT),
        )(emb_slab, sim_slab, prepared["w1_block"], prepared["b1_tile"],
          prepared["w2a_block"], prepared["w2b_block"], prepared["b2_tile"])

        outs.append(out_slab.reshape(B_main, N))        # free reshape back

    if B_main < B:
        # <=7-row ragged tail: plain jnp (avoids a full-array jnp.pad copy).
        emb_t = emb[B_main:].astype(jnp.float32)
        sim_t = sim[B_main:].astype(jnp.float32)
        r_t = jnp.tanh(emb_t @ prepared["w1_t"] + prepared["b1"])
        cat_t = jnp.concatenate([sim_t, r_t], axis=-1)
        outs.append(jnp.tanh(cat_t @ prepared["w2_t"] + prepared["b2"]))

    return outs[0] if len(outs) == 1 else jnp.concatenate(outs, axis=0)


# ---------------------------------------------------------------------------
# Init + reference
# ---------------------------------------------------------------------------
def _init_params(key, node_embedding_dim, num_neighbors):
    """Deterministic PyTorch-style (uniform +/- 1/sqrt(fan_in)) init."""
    k1, k2, k3, k4 = jax.random.split(key, 4)
    bound1 = 1.0 / jnp.sqrt(jnp.float32(node_embedding_dim))
    bound2 = 1.0 / jnp.sqrt(jnp.float32(2 * num_neighbors))
    return {
        "w1": jax.random.uniform(k1, (num_neighbors, node_embedding_dim),
                                 jnp.float32, -bound1, bound1),
        "b1": jax.random.uniform(k2, (num_neighbors,), jnp.float32, -bound1, bound1),
        "w2": jax.random.uniform(k3, (num_neighbors, 2 * num_neighbors),
                                 jnp.float32, -bound2, bound2),
        "b2": jax.random.uniform(k4, (num_neighbors,), jnp.float32, -bound2, bound2),
    }


def _reference(new_embedding, new_similarity, params):
    emb = new_embedding.reshape(new_embedding.shape[0], -1)
    residual = jnp.tanh(emb @ params["w1"].T + params["b1"])
    cat = jnp.concatenate([new_similarity, residual], axis=-1)
    return jnp.tanh(cat @ params["w2"].T + params["b2"])


if __name__ == "__main__":
    # args.node_embedding_dim = 32, args.num_neighbors = 16, batch = 8
    batch = 8
    node_embedding_dim = 32
    num_neighbors = 16

    key = jax.random.PRNGKey(0)
    k_emb, k_sim, k_par, k_emb2, k_sim2 = jax.random.split(key, 5)

    new_embedding = jax.random.normal(k_emb, (batch, node_embedding_dim), jnp.float32)
    new_similarity = jax.random.normal(k_sim, (batch, num_neighbors), jnp.float32)
    params = _init_params(k_par, node_embedding_dim, num_neighbors)

    fwd = jax.jit(residual_distiller_pallas)
    ref = _reference(new_embedding, new_similarity, params)

    # --- strict f32 path ---------------------------------------------------
    prep_f32 = prepare_params(params, compute_dtype=jnp.float32)
    out_f32 = jax.block_until_ready(fwd(new_embedding, new_similarity, prep_f32))
    assert out_f32.shape == (batch, num_neighbors)
    assert jnp.allclose(out_f32, ref, atol=1e-5, rtol=1e-5), "f32 mismatch vs. reference"

    # --- bf16-operand fast path (halved HBM traffic; f32 accumulation) -----
    prep_bf16 = prepare_params(params, compute_dtype=jnp.bfloat16)
    out_bf16 = jax.block_until_ready(
        fwd(new_embedding.astype(jnp.bfloat16),
            new_similarity.astype(jnp.bfloat16), prep_bf16))
    assert out_bf16.shape == (batch, num_neighbors)
    assert jnp.allclose(out_bf16, ref, atol=5e-2, rtol=5e-2), "bf16 mismatch vs. reference"

    # --- ragged batch: multi-step grid (partial last block) + jnp tail -----
    batch_ragged = 75                      # 72 rows via kernel (grid=2), 3-row tail
    emb2 = jax.random.normal(k_emb2, (batch_ragged, node_embedding_dim), jnp.float32)
    sim2 = jax.random.normal(k_sim2, (batch_ragged, num_neighbors), jnp.float32)
    out2 = jax.block_until_ready(fwd(emb2, sim2, prep_f32))
    ref2 = _reference(emb2, sim2, params)
    assert out2.shape == (batch_ragged, num_neighbors)
    assert jnp.allclose(out2, ref2, atol=1e-5, rtol=1e-5), "ragged-batch mismatch"

    print("KERNEL_OK")
</pallas_src>

<mosaic_0001>
module attributes {stable_mosaic.version = 11 : i64} {
  func.func @_distiller_kernel(%arg0: i32, %arg1: memref<1x256xf32, #tpu.memory_space<vmem>>, %arg2: memref<1x128xf32, #tpu.memory_space<vmem>>, %arg3: memref<256x128xf32, #tpu.memory_space<vmem>>, %arg4: memref<1x128xf32, #tpu.memory_space<vmem>>, %arg5: memref<128x128xf32, #tpu.memory_space<vmem>>, %arg6: memref<128x128xf32, #tpu.memory_space<vmem>>, %arg7: memref<1x128xf32, #tpu.memory_space<vmem>>, %arg8: memref<1x128xf32, #tpu.memory_space<vmem>>) attributes {dimension_semantics = [#tpu.dimension_semantics<parallel>], iteration_bounds = array<i64: 1>, scalar_prefetch = 0 : i64, scratch_operands = 0 : i64, tpu.core_type = #tpu.core_type<tc>, window_params = [{transform_indices = @transform_0, window_bounds = array<i64: 1, 256>}, {transform_indices = @transform_1, window_bounds = array<i64: 1, 128>}, {pipeline_mode = #tpu.pipeline_mode<synchronous>, transform_indices = @transform_2, window_bounds = array<i64: 256, 128>}, {pipeline_mode = #tpu.pipeline_mode<synchronous>, transform_indices = @transform_3, window_bounds = array<i64: 1, 128>}, {pipeline_mode = #tpu.pipeline_mode<synchronous>, transform_indices = @transform_4, window_bounds = array<i64: 128, 128>}, {pipeline_mode = #tpu.pipeline_mode<synchronous>, transform_indices = @transform_5, window_bounds = array<i64: 128, 128>}, {pipeline_mode = #tpu.pipeline_mode<synchronous>, transform_indices = @transform_6, window_bounds = array<i64: 1, 128>}, {transform_indices = @transform_7, window_bounds = array<i64: 1, 128>}]} {
    %c0 = arith.constant 0 : index
    %c0_0 = arith.constant 0 : index
    %0 = vector.load %arg1[%c0, %c0_0] : memref<1x256xf32, #tpu.memory_space<vmem>>, vector<1x256xf32>
    %c0_1 = arith.constant 0 : index
    %c0_2 = arith.constant 0 : index
    %1 = vector.load %arg3[%c0_1, %c0_2] : memref<256x128xf32, #tpu.memory_space<vmem>>, vector<256x128xf32>
    %cst = arith.constant dense<0.000000e+00> : vector<1x128xf32>
    %2 = tpu.matmul %0, %1, %cst {dimension_numbers = #tpu.dot_dimension_numbers<[1], [0], [0], [1], [0, 0, 1, 1], [], []>} : vector<1x256xf32>, vector<256x128xf32>, vector<1x128xf32> -> vector<1x128xf32>
    %c0_3 = arith.constant 0 : index
    %c0_4 = arith.constant 0 : index
    %3 = vector.load %arg4[%c0_3, %c0_4] : memref<1x128xf32, #tpu.memory_space<vmem>>, vector<1x128xf32>
    %4 = arith.addf %2, %3 : vector<1x128xf32>
    %5 = math.tanh %4 : vector<1x128xf32>
    %c0_5 = arith.constant 0 : index
    %c0_6 = arith.constant 0 : index
    %6 = vector.load %arg6[%c0_5, %c0_6] : memref<128x128xf32, #tpu.memory_space<vmem>>, vector<128x128xf32>
    %c0_7 = arith.constant 0 : index
    %c0_8 = arith.constant 0 : index
    %7 = vector.load %arg2[%c0_7, %c0_8] : memref<1x128xf32, #tpu.memory_space<vmem>>, vector<1x128xf32>
    %c0_9 = arith.constant 0 : index
    %c0_10 = arith.constant 0 : index
    %8 = vector.load %arg5[%c0_9, %c0_10] : memref<128x128xf32, #tpu.memory_space<vmem>>, vector<128x128xf32>
    %cst_11 = arith.constant dense<0.000000e+00> : vector<1x128xf32>
    %9 = tpu.matmul %7, %8, %cst_11 {dimension_numbers = #tpu.dot_dimension_numbers<[1], [0], [0], [1], [0, 0, 1, 1], [], []>} : vector<1x128xf32>, vector<128x128xf32>, vector<1x128xf32> -> vector<1x128xf32>
    %cst_12 = arith.constant dense<0.000000e+00> : vector<1x128xf32>
    %10 = tpu.matmul %5, %6, %cst_12 {dimension_numbers = #tpu.dot_dimension_numbers<[1], [0], [0], [1], [0, 0, 1, 1], [], []>} : vector<1x128xf32>, vector<128x128xf32>, vector<1x128xf32> -> vector<1x128xf32>
    %11 = arith.addf %9, %10 : vector<1x128xf32>
    %c0_13 = arith.constant 0 : index
    %c0_14 = arith.constant 0 : index
    %12 = vector.load %arg7[%c0_13, %c0_14] : memref<1x128xf32, #tpu.memory_space<vmem>>, vector<1x128xf32>
    %13 = arith.addf %11, %12 : vector<1x128xf32>
    %14 = math.tanh %13 : vector<1x128xf32>
    %c0_15 = arith.constant 0 : index
    %c0_16 = arith.constant 0 : index
    %15 = vector.load %arg8[%c0_15, %c0_16] : memref<1x128xf32, #tpu.memory_space<vmem>>, vector<1x128xf32>
    tpu.vector_store %arg8[%c0_15, %c0_16], %14 {strides = array<i32>} : memref<1x128xf32, #tpu.memory_space<vmem>>, vector<1x128xf32>,
    return
  }
  func.func @transform_0(%arg0: i32) -> (i32, i32) {
    %c0_i32 = arith.constant 0 : i32
    %c0_i32_0 = arith.constant 0 : i32
    return %arg0, %c0_i32 : i32, i32
  }
  func.func @transform_1(%arg0: i32) -> (i32, i32) {
    %c0_i32 = arith.constant 0 : i32
    %c0_i32_0 = arith.constant 0 : i32
    return %arg0, %c0_i32 : i32, i32
  }
  func.func @transform_2(%arg0: i32) -> (i32, i32) {
    %c0_i32 = arith.constant 0 : i32
    %c0_i32_0 = arith.constant 0 : i32
    %c0_i32_1 = arith.constant 0 : i32
    return %c0_i32, %c0_i32_0 : i32, i32
  }
  func.func @transform_3(%arg0: i32) -> (i32, i32) {
    %c0_i32 = arith.constant 0 : i32
    %c0_i32_0 = arith.constant 0 : i32
    %c0_i32_1 = arith.constant 0 : i32
    return %c0_i32, %c0_i32_0 : i32, i32
  }
  func.func @transform_4(%arg0: i32) -> (i32, i32) {
    %c0_i32 = arith.constant 0 : i32
    %c0_i32_0 = arith.constant 0 : i32
    %c0_i32_1 = arith.constant 0 : i32
    return %c0_i32, %c0_i32_0 : i32, i32
  }
  func.func @transform_5(%arg0: i32) -> (i32, i32) {
    %c0_i32 = arith.constant 0 : i32
    %c0_i32_0 = arith.constant 0 : i32
    %c0_i32_1 = arith.constant 0 : i32
    return %c0_i32, %c0_i32_0 : i32, i32
  }
  func.func @transform_6(%arg0: i32) -> (i32, i32) {
    %c0_i32 = arith.constant 0 : i32
    %c0_i32_0 = arith.constant 0 : i32
    %c0_i32_1 = arith.constant 0 : i32
    return %c0_i32, %c0_i32_0 : i32, i32
  }
  func.func @transform_7(%arg0: i32) -> (i32, i32) {
    %c0_i32 = arith.constant 0 : i32
    %c0_i32_0 = arith.constant 0 : i32
    return %arg0, %c0_i32 : i32, i32
  }
}

</mosaic_0001>

<llo_original>
// kernel: residual_distiller_pallas.1
$region0: #{residual_distiller_pallas.1}
  #allocation0 [shape = 'u32[]', space=smem, size = 0x4, offset = 0x4, fixed_abs, tag = 'smem constant byte address 0x4 - core index']
  #allocation1 [shape = 'u32[144,128]{1,0:T(1,128)}', space=vmem, size = 0x12000, scoped, tag = 'internal scratch']
  %s0 = inlined_call_operand.vmem [shape: f32[1,256], index: 0, kind: input, shape index: {}]
  %s1 = inlined_call_operand.vmem [shape: f32[1,128], index: 1, kind: input, shape index: {}]
  %s2 = inlined_call_operand.hbm [shape: f32[256,128], index: 2, kind: input, shape index: {}]
  %s3 = inlined_call_operand.vmem [shape: f32[1,128], index: 3, kind: input, shape index: {}]
  %s4 = inlined_call_operand.hbm [shape: f32[128,128], index: 4, kind: input, shape index: {}]
  %s5 = inlined_call_operand.hbm [shape: f32[128,128], index: 5, kind: input, shape index: {}]
  %s6 = inlined_call_operand.vmem [shape: f32[1,128], index: 6, kind: input, shape index: {}]
  %s7 = inlined_call_operand.vmem [shape: f32[1,128], index: 7, kind: output, shape index: {}]
  %s8 = sld [smem:[#allocation0]]
  $region50: #{residual_distiller_pallas.1} parent=0
    _
  %s10 = ssub.s32 1, %s8
  %s11 = scalar_select 0, %s10, %s8
  $region1: #{residual_distiller_pallas.1} parent=0
    #allocation2 [shape = 'u8[131072]{0}', space=vmem, size = 0x20000, scoped, tag = 'input window, operand 2, single buffered']
    #allocation3 [shape = 's32[1]{0}', space=sflag, size = 0x4, scoped, tag = 'scoped memory for residual_distiller_pallas.1']
    #allocation4 [shape = 'u8[65536]{0}', space=vmem, size = 0x10000, scoped, tag = 'input window, operand 4, single buffered']
    #allocation5 [shape = 's32[1]{0}', space=sflag, size = 0x4, scoped, tag = 'scoped memory for residual_distiller_pallas.1']
    #allocation6 [shape = 'u8[65536]{0}', space=vmem, size = 0x10000, scoped, tag = 'input window, operand 5, single buffered']
    %12 = vsyncpa [#allocation3], 0
    %13 = vsyncpa [#allocation5], 0
    // Predicated region
    $region2: #{residual_distiller_pallas.1} parent=1 // pred_check
      _
    $region3: #{residual_distiller_pallas.1} parent=1 // pred_check_branch
      %15 = sbr.rel (0) target = $region5
    $region4: #{residual_distiller_pallas.1} parent=1 // pred_region
      _
    $region5: #{residual_distiller_pallas.1} parent=1 // pred_fallthru
      _
    // Predicated region
    $region6: #{residual_distiller_pallas.1} parent=1 // pred_check
      _
    $region7: #{residual_distiller_pallas.1} parent=1 // pred_check_branch
      %17 = sbr.rel (0) target = $region9
    $region8: #{residual_distiller_pallas.1} parent=1 // pred_region
      _
    $region9: #{residual_distiller_pallas.1} parent=1 // pred_fallthru
      _
    // Predicated region
    $region10: #{residual_distiller_pallas.1} parent=1 // pred_check
      _
    $region11: #{residual_distiller_pallas.1} parent=1 // pred_check_branch
      %19 = sbr.rel (0) target = $region13
    $region12: #{residual_distiller_pallas.1} parent=1 // pred_region
      %s21 = ssub.s32 4096, 4096
      %22 = vsyncadd [#allocation3], %s21
      %s23 = sshll.u32 [#allocation2], 4
      %s24 = int_to_ptr.vmem [resolvable:$true] %s23
      %29 = dma.hbm_to_vmem [thread:$0]  %s2, 4096, %s24, [#allocation3], 128, 128, 8
    $region13: #{residual_distiller_pallas.1} parent=1 // pred_fallthru
      _
    // Predicated region
    $region14: #{residual_distiller_pallas.1} parent=1 // pred_check
      _
    $region15: #{residual_distiller_pallas.1} parent=1 // pred_check_branch
      %31 = sbr.rel (0) target = $region17
    $region16: #{residual_distiller_pallas.1} parent=1 // pred_region
      _
    $region17: #{residual_distiller_pallas.1} parent=1 // pred_fallthru
      _
    // Predicated region
    $region18: #{residual_distiller_pallas.1} parent=1 // pred_check
      _
    $region19: #{residual_distiller_pallas.1} parent=1 // pred_check_branch
      %33 = sbr.rel (0) target = $region21
    $region20: #{residual_distiller_pallas.1} parent=1 // pred_region
      %s35 = ssub.s32 2048, 2048
      %36 = vsyncadd [#allocation5], %s35
      %s37 = sshll.u32 [#allocation4], 4
      %s38 = int_to_ptr.vmem [resolvable:$true] %s37
      %43 = dma.hbm_to_vmem [thread:$0]  %s4, 2048, %s38, [#allocation5], 128, 128, 8
    $region21: #{residual_distiller_pallas.1} parent=1 // pred_fallthru
      _
    // Predicated region
    $region22: #{residual_distiller_pallas.1} parent=1 // pred_check
      _
    $region23: #{residual_distiller_pallas.1} parent=1 // pred_check_branch
      %45 = sbr.rel (0) target = $region25
    $region24: #{residual_distiller_pallas.1} parent=1 // pred_region
      %s47 = ssub.s32 2048, 2048
      %48 = vsyncadd [#allocation5], %s47
      %s49 = sshll.u32 [#allocation6], 4
      %s50 = int_to_ptr.vmem [resolvable:$true] %s49
      %55 = dma.hbm_to_vmem [thread:$0]  %s5, 2048, %s50, [#allocation5], 128, 128, 8
    $region25: #{residual_distiller_pallas.1} parent=1 // pred_fallthru
      _
    // Predicated region
    $region26: #{residual_distiller_pallas.1} parent=1 // pred_check
      _
    $region27: #{residual_distiller_pallas.1} parent=1 // pred_check_branch
      %57 = sbr.rel (0) target = $region29
    $region28: #{residual_distiller_pallas.1} parent=1 // pred_region
      _
    $region29: #{residual_distiller_pallas.1} parent=1 // pred_fallthru
      _
    // Predicated region
    $region30: #{residual_distiller_pallas.1} parent=1 // pred_check
      _
    $region31: #{residual_distiller_pallas.1} parent=1 // pred_check_branch
      %59 = sbr.rel (0) target = $region33
    $region32: #{residual_distiller_pallas.1} parent=1 // pred_region
      %60 = dma.done [#allocation3], 4096
    $region33: #{residual_distiller_pallas.1} parent=1 // pred_fallthru
      _
    // Predicated region
    $region34: #{residual_distiller_pallas.1} parent=1 // pred_check
      _
    $region35: #{residual_distiller_pallas.1} parent=1 // pred_check_branch
      %62 = sbr.rel (0) target = $region37
    $region36: #{residual_distiller_pallas.1} parent=1 // pred_region
      %63 = dma.done [#allocation5], 2048
    $region37: #{residual_distiller_pallas.1} parent=1 // pred_fallthru
      _
    // Predicated region
    $region38: #{residual_distiller_pallas.1} parent=1 // pred_check
      _
    $region39: #{residual_distiller_pallas.1} parent=1 // pred_check_branch
      %65 = sbr.rel (0) target = $region41
    $region40: #{residual_distiller_pallas.1} parent=1 // pred_region
      %66 = dma.done [#allocation5], 2048
    $region41: #{residual_distiller_pallas.1} parent=1 // pred_fallthru
      _
    %v67 = vld [vmem:[%s0] sm:$0x3]
    %v68 = vld [vmem:[#allocation2] sm:$0xff]
    %v69 = vld [vmem:[#allocation2 + $0x8] sm:$0xff]
    %v70 = vld [vmem:[#allocation2 + $0x10] sm:$0xff]
    %v71 = vld [vmem:[#allocation2 + $0x18] sm:$0xff]
    %v72 = vld [vmem:[#allocation2 + $0x20] sm:$0xff]
    %v73 = vld [vmem:[#allocation2 + $0x28] sm:$0xff]
    %v74 = vld [vmem:[#allocation2 + $0x30] sm:$0xff]
    %v75 = vld [vmem:[#allocation2 + $0x38] sm:$0xff]
    %v76 = vld [vmem:[#allocation2 + $0x40] sm:$0xff]
    %v77 = vld [vmem:[#allocation2 + $0x48] sm:$0xff]
    %v78 = vld [vmem:[#allocation2 + $0x50] sm:$0xff]
    %v79 = vld [vmem:[#allocation2 + $0x58] sm:$0xff]
    %v80 = vld [vmem:[#allocation2 + $0x60] sm:$0xff]
    %v81 = vld [vmem:[#allocation2 + $0x68] sm:$0xff]
    %v82 = vld [vmem:[#allocation2 + $0x70] sm:$0xff]
    %v83 = vld [vmem:[#allocation2 + $0x78] sm:$0xff]
    %v84 = vld [vmem:[#allocation2 + $0x80] sm:$0xff]
    %v85 = vld [vmem:[#allocation2 + $0x88] sm:$0xff]
    %v86 = vld [vmem:[#allocation2 + $0x90] sm:$0xff]
    %v87 = vld [vmem:[#allocation2 + $0x98] sm:$0xff]
    %v88 = vld [vmem:[#allocation2 + $0xa0] sm:$0xff]
    %v89 = vld [vmem:[#allocation2 + $0xa8] sm:$0xff]
    %v90 = vld [vmem:[#allocation2 + $0xb0] sm:$0xff]
    %v91 = vld [vmem:[#allocation2 + $0xb8] sm:$0xff]
    %v92 = vld [vmem:[#allocation2 + $0xc0] sm:$0xff]
    %v93 = vld [vmem:[#allocation2 + $0xc8] sm:$0xff]
    %v94 = vld [vmem:[#allocation2 + $0xd0] sm:$0xff]
    %v95 = vld [vmem:[#allocation2 + $0xd8] sm:$0xff]
    %v96 = vld [vmem:[#allocation2 + $0xe0] sm:$0xff]
    %v97 = vld [vmem:[#allocation2 + $0xe8] sm:$0xff]
    %v98 = vld [vmem:[#allocation2 + $0xf0] sm:$0xff]
    %v99 = vld [vmem:[#allocation2 + $0xf8] sm:$0xff]
    %v100 = vld [vmem:[%s3] sm:$0x1]
    %v102 = vlaneseq
    %v103 = vshrl.u32 %v102, 7
    %v104 = vsub.s32 0, %v103
    %v105 = vrot.slane %v67, %v104
    %v106 = vlaneseq
    %v107 = vshrl.u32 %v106, 7
    %v108 = vsub.s32 1, %v107
    %v109 = vrot.slane %v67, %v108
    %112 = vmatprep.subr.mxu0 0.0
    %113 = vmatpush1.msra.mxu0 %v68
    %114 = vmatprep.subr.mxu0 0.0
    %115 = vmatpush1.msra.mxu0 %v69
    %116 = vmatprep.subr.mxu0 0.0
    %117 = vmatpush1.msra.mxu0 %v70
    %118 = vmatprep.subr.mxu0 0.0
    %119 = vmatpush1.msra.mxu0 %v71
    %120 = vmatprep.subr.mxu0 0.0
    %121 = vmatpush1.msra.mxu0 %v72
    %122 = vmatprep.subr.mxu0 0.0
    %123 = vmatpush1.msra.mxu0 %v73
    %124 = vmatprep.subr.mxu0 0.0
    %125 = vmatpush1.msra.mxu0 %v74
    %126 = vmatprep.subr.mxu0 0.0
    %127 = vmatpush1.msra.mxu0 %v75
    %128 = vmatprep.subr.mxu0 0.0
    %129 = vmatpush1.msra.mxu0 %v76
    %130 = vmatprep.subr.mxu0 0.0
    %131 = vmatpush1.msra.mxu0 %v77
    %132 = vmatprep.subr.mxu0 0.0
    %133 = vmatpush1.msra.mxu0 %v78
    %134 = vmatprep.subr.mxu0 0.0
    %135 = vmatpush1.msra.mxu0 %v79
    %136 = vmatprep.subr.mxu0 0.0
    %137 = vmatpush1.msra.mxu0 %v80
    %138 = vmatprep.subr.mxu0 0.0
    %139 = vmatpush1.msra.mxu0 %v81
    %140 = vmatprep.subr.mxu0 0.0
    %141 = vmatpush1.msra.mxu0 %v82
    %142 = vmatprep.subr.mxu0 0.0
    %143 = vmatpush1.msra.mxu0 %v83
    %144 = vmatprep.subr.mxu0 0.0
    %145 = vmatpush1.msra.mxu0 %v84
    %146 = vmatprep.subr.mxu0 0.0
    %147 = vmatpush1.msra.mxu0 %v85
    %148 = vmatprep.subr.mxu0 0.0
    %149 = vmatpush1.msra.mxu0 %v86
    %150 = vmatprep.subr.mxu0 0.0
    %151 = vmatpush1.msra.mxu0 %v87
    %152 = vmatprep.subr.mxu0 0.0
    %153 = vmatpush1.msra.mxu0 %v88
    %154 = vmatprep.subr.mxu0 0.0
    %155 = vmatpush1.msra.mxu0 %v89
    %156 = vmatprep.subr.mxu0 0.0
    %157 = vmatpush1.msra.mxu0 %v90
    %158 = vmatprep.subr.mxu0 0.0
    %159 = vmatpush1.msra.mxu0 %v91
    %160 = vmatprep.subr.mxu0 0.0
    %161 = vmatpush1.msra.mxu0 %v92
    %162 = vmatprep.subr.mxu0 0.0
    %163 = vmatpush1.msra.mxu0 %v93
    %164 = vmatprep.subr.mxu0 0.0
    %165 = vmatpush1.msra.mxu0 %v94
    %166 = vmatprep.subr.mxu0 0.0
    %167 = vmatpush1.msra.mxu0 %v95
    %168 = vmatprep.subr.mxu0 0.0
    %169 = vmatpush1.msra.mxu0 %v96
    %170 = vmatprep.subr.mxu0 0.0
    %171 = vmatpush1.msra.mxu0 %v97
    %172 = vmatprep.subr.mxu0 0.0
    %173 = vmatpush1.msra.mxu0 %v98
    %174 = vmatprep.subr.mxu0 0.0
    %175 = vmatpush1.msra.mxu0 %v99
    %176 = vmatprep.mubr.f32.mxu0 %v109
    %177 = vmatmul.mubr.f32.gmra.mrb[0].mxu0 %v105
    %v178 = vpop.f32.mrb[0].mxu0
    %v179 = vadd.f32 %v100, %v178
    %v180 = vpop.f32.mrb[0].mxu0
    %181 = vdwg.mxu0
    %v182 = vtanh.pop %v179
    %v183 = vld [vmem:[#allocation6] sm:$0xff]
    %v184 = vld [vmem:[#allocation6 + $0x8] sm:$0xff]
    %v185 = vld [vmem:[#allocation6 + $0x10] sm:$0xff]
    %v186 = vld [vmem:[#allocation6 + $0x18] sm:$0xff]
    %v187 = vld [vmem:[#allocation6 + $0x20] sm:$0xff]
    %v188 = vld [vmem:[#allocation6 + $0x28] sm:$0xff]
    %v189 = vld [vmem:[#allocation6 + $0x30] sm:$0xff]
    %v190 = vld [vmem:[#allocation6 + $0x38] sm:$0xff]
    %v191 = vld [vmem:[#allocation6 + $0x40] sm:$0xff]
    %v192 = vld [vmem:[#allocation6 + $0x48] sm:$0xff]
    %v193 = vld [vmem:[#allocation6 + $0x50] sm:$0xff]
    %v194 = vld [vmem:[#allocation6 + $0x58] sm:$0xff]
    %v195 = vld [vmem:[#allocation6 + $0x60] sm:$0xff]
    %v196 = vld [vmem:[#allocation6 + $0x68] sm:$0xff]
    %v197 = vld [vmem:[#allocation6 + $0x70] sm:$0xff]
    %v198 = vld [vmem:[#allocation6 + $0x78] sm:$0xff]
    %v199 = vld [vmem:[%s1] sm:$0x1]
    %v200 = vld [vmem:[#allocation4] sm:$0xff]
    %v201 = vld [vmem:[#allocation4 + $0x8] sm:$0xff]
    %v202 = vld [vmem:[#allocation4 + $0x10] sm:$0xff]
    %v203 = vld [vmem:[#allocation4 + $0x18] sm:$0xff]
    %v204 = vld [vmem:[#allocation4 + $0x20] sm:$0xff]
    %v205 = vld [vmem:[#allocation4 + $0x28] sm:$0xff]
    %v206 = vld [vmem:[#allocation4 + $0x30] sm:$0xff]
    %v207 = vld [vmem:[#allocation4 + $0x38] sm:$0xff]
    %v208 = vld [vmem:[#allocation4 + $0x40] sm:$0xff]
    %v209 = vld [vmem:[#allocation4 + $0x48] sm:$0xff]
    %v210 = vld [vmem:[#allocation4 + $0x50] sm:$0xff]
    %v211 = vld [vmem:[#allocation4 + $0x58] sm:$0xff]
    %v212 = vld [vmem:[#allocation4 + $0x60] sm:$0xff]
    %v213 = vld [vmem:[#allocation4 + $0x68] sm:$0xff]
    %v214 = vld [vmem:[#allocation4 + $0x70] sm:$0xff]
    %v215 = vld [vmem:[#allocation4 + $0x78] sm:$0xff]
    %216 = vmatprep.subr.mxu0 0.0
    %217 = vmatpush1.msra.mxu0 %v183
    %218 = vmatprep.subr.mxu0 0.0
    %219 = vmatpush1.msra.mxu0 %v184
    %220 = vmatprep.subr.mxu0 0.0
    %221 = vmatpush1.msra.mxu0 %v185
    %222 = vmatprep.subr.mxu0 0.0
    %223 = vmatpush1.msra.mxu0 %v186
    %224 = vmatprep.subr.mxu0 0.0
    %225 = vmatpush1.msra.mxu0 %v187
    %226 = vmatprep.subr.mxu0 0.0
    %227 = vmatpush1.msra.mxu0 %v188
    %228 = vmatprep.subr.mxu0 0.0
    %229 = vmatpush1.msra.mxu0 %v189
    %230 = vmatprep.subr.mxu0 0.0
    %231 = vmatpush1.msra.mxu0 %v190
    %232 = vmatprep.subr.mxu0 0.0
    %233 = vmatpush1.msra.mxu0 %v191
    %234 = vmatprep.subr.mxu0 0.0
    %235 = vmatpush1.msra.mxu0 %v192
    %236 = vmatprep.subr.mxu0 0.0
    %237 = vmatpush1.msra.mxu0 %v193
    %238 = vmatprep.subr.mxu0 0.0
    %239 = vmatpush1.msra.mxu0 %v194
    %240 = vmatprep.subr.mxu0 0.0
    %241 = vmatpush1.msra.mxu0 %v195
    %242 = vmatprep.subr.mxu0 0.0
    %243 = vmatpush1.msra.mxu0 %v196
    %244 = vmatprep.subr.mxu0 0.0
    %245 = vmatpush1.msra.mxu0 %v197
    %246 = vmatprep.subr.mxu0 0.0
    %247 = vmatpush1.msra.mxu0 %v198
    %248 = vmatprep.subr.mxu0 0.0
    %249 = vmatpush1.msra.mxu0 0.0
    %250 = vmatprep.subr.mxu0 0.0
    %251 = vmatpush1.msra.mxu0 0.0
    %252 = vmatprep.subr.mxu0 0.0
    %253 = vmatpush1.msra.mxu0 0.0
    %254 = vmatprep.subr.mxu0 0.0
    %255 = vmatpush1.msra.mxu0 0.0
    %256 = vmatprep.subr.mxu0 0.0
    %257 = vmatpush1.msra.mxu0 0.0
    %258 = vmatprep.subr.mxu0 0.0
    %259 = vmatpush1.msra.mxu0 0.0
    %260 = vmatprep.subr.mxu0 0.0
    %261 = vmatpush1.msra.mxu0 0.0
    %262 = vmatprep.subr.mxu0 0.0
    %263 = vmatpush1.msra.mxu0 0.0
    %264 = vmatprep.subr.mxu0 0.0
    %265 = vmatpush1.msra.mxu0 0.0
    %266 = vmatprep.subr.mxu0 0.0
    %267 = vmatpush1.msra.mxu0 0.0
    %268 = vmatprep.subr.mxu0 0.0
    %269 = vmatpush1.msra.mxu0 0.0
    %270 = vmatprep.subr.mxu0 0.0
    %271 = vmatpush1.msra.mxu0 0.0
    %272 = vmatprep.subr.mxu0 0.0
    %273 = vmatpush1.msra.mxu0 0.0
    %274 = vmatprep.subr.mxu0 0.0
    %275 = vmatpush1.msra.mxu0 0.0
    %276 = vmatprep.subr.mxu0 0.0
    %277 = vmatpush1.msra.mxu0 0.0
    %278 = vmatprep.subr.mxu0 0.0
    %279 = vmatpush1.msra.mxu0 0.0
    %280 = vmatprep.mubr.f32.mxu0 0.0
    %281 = vmatmul.mubr.f32.gmra.mrb[0].mxu0 %v182
    %v282 = vpop.f32.mrb[0].mxu0
    %v283 = vadd.f32 0.0, %v282
    %v284 = vpop.f32.mrb[0].mxu0
    %285 = vdwg.mxu0
    %286 = vmatprep.subr.mxu0 0.0
    %287 = vmatpush1.msra.mxu0 %v200
    %288 = vmatprep.subr.mxu0 0.0
    %289 = vmatpush1.msra.mxu0 %v201
    %290 = vmatprep.subr.mxu0 0.0
    %291 = vmatpush1.msra.mxu0 %v202
    %292 = vmatprep.subr.mxu0 0.0
    %293 = vmatpush1.msra.mxu0 %v203
    %294 = vmatprep.subr.mxu0 0.0
    %295 = vmatpush1.msra.mxu0 %v204
    %296 = vmatprep.subr.mxu0 0.0
    %297 = vmatpush1.msra.mxu0 %v205
    %298 = vmatprep.subr.mxu0 0.0
    %299 = vmatpush1.msra.mxu0 %v206
    %300 = vmatprep.subr.mxu0 0.0
    %301 = vmatpush1.msra.mxu0 %v207
    %302 = vmatprep.subr.mxu0 0.0
    %303 = vmatpush1.msra.mxu0 %v208
    %304 = vmatprep.subr.mxu0 0.0
    %305 = vmatpush1.msra.mxu0 %v209
    %306 = vmatprep.subr.mxu0 0.0
    %307 = vmatpush1.msra.mxu0 %v210
    %308 = vmatprep.subr.mxu0 0.0
    %309 = vmatpush1.msra.mxu0 %v211
    %310 = vmatprep.subr.mxu0 0.0
    %311 = vmatpush1.msra.mxu0 %v212
    %312 = vmatprep.subr.mxu0 0.0
    %313 = vmatpush1.msra.mxu0 %v213
    %314 = vmatprep.subr.mxu0 0.0
    %315 = vmatpush1.msra.mxu0 %v214
    %316 = vmatprep.subr.mxu0 0.0
    %317 = vmatpush1.msra.mxu0 %v215
    %318 = vmatprep.subr.mxu0 0.0
    %319 = vmatpush1.msra.mxu0 0.0
    %320 = vmatprep.subr.mxu0 0.0
    %321 = vmatpush1.msra.mxu0 0.0
    %322 = vmatprep.subr.mxu0 0.0
    %323 = vmatpush1.msra.mxu0 0.0
    %324 = vmatprep.subr.mxu0 0.0
    %325 = vmatpush1.msra.mxu0 0.0
    %326 = vmatprep.subr.mxu0 0.0
    %327 = vmatpush1.msra.mxu0 0.0
    %328 = vmatprep.subr.mxu0 0.0
    %329 = vmatpush1.msra.mxu0 0.0
    %330 = vmatprep.subr.mxu0 0.0
    %331 = vmatpush1.msra.mxu0 0.0
    %332 = vmatprep.subr.mxu0 0.0
    %333 = vmatpush1.msra.mxu0 0.0
    %334 = vmatprep.subr.mxu0 0.0
    %335 = vmatpush1.msra.mxu0 0.0
    %336 = vmatprep.subr.mxu0 0.0
    %337 = vmatpush1.msra.mxu0 0.0
    %338 = vmatprep.subr.mxu0 0.0
    %339 = vmatpush1.msra.mxu0 0.0
    %340 = vmatprep.subr.mxu0 0.0
    %341 = vmatpush1.msra.mxu0 0.0
    %342 = vmatprep.subr.mxu0 0.0
    %343 = vmatpush1.msra.mxu0 0.0
    %344 = vmatprep.subr.mxu0 0.0
    %345 = vmatpush1.msra.mxu0 0.0
    %346 = vmatprep.subr.mxu0 0.0
    %347 = vmatpush1.msra.mxu0 0.0
    %348 = vmatprep.subr.mxu0 0.0
    %349 = vmatpush1.msra.mxu0 0.0
    %350 = vmatprep.mubr.f32.mxu0 0.0
    %351 = vmatmul.mubr.f32.gmra.mrb[0].mxu0 %v199
    %v352 = vpop.f32.mrb[0].mxu0
    %v353 = vadd.f32 %v283, %v352
    %v354 = vpop.f32.mrb[0].mxu0
    %355 = vdwg.mxu0
    %v356 = vld [vmem:[%s6] sm:$0x1]
    %v357 = vadd.f32 %v353, %v356
    %v358 = vtanh.pop %v357
    %359 = vst [vmem:[%s7] sm:$0x1] %v358
    // Predicated region
    $region42: #{residual_distiller_pallas.1} parent=1 // pred_check
      _
    $region43: #{residual_distiller_pallas.1} parent=1 // pred_check_branch
      %361 = sbr.rel (0) target = $region45
    $region44: #{residual_distiller_pallas.1} parent=1 // pred_region
      _
    $region45: #{residual_distiller_pallas.1} parent=1 // pred_fallthru
      _
    // Predicated region
    $region46: #{residual_distiller_pallas.1} parent=1 // pred_check
      _
    $region47: #{residual_distiller_pallas.1} parent=1 // pred_check_branch
      %363 = sbr.rel (0) target = $region49
    $region48: #{residual_distiller_pallas.1} parent=1 // pred_region
      _
    $region49: #{residual_distiller_pallas.1} parent=1 // pred_fallthru
      _
    %364 = vsyncpa [#allocation3], 1
    %365 = vsyncpa [#allocation5], 1

</llo_original>
